<compile_context>
chip_gen: v6e
topology: v6e:2x2x1
jax: 0.10.0
libtpu: 0.0.40
codegen_flags: <defaults>
</compile_context>

<pallas_src>
import functools

import jax
import jax.numpy as jnp
from jax.experimental import pallas as pl
from jax.experimental.pallas import tpu as pltpu

EPS = 1e-5


# ----------------------------------------------------------------------------
# Fused kernel: per batch element n
#   z    = relu( xg @ [Kg | Wd_blockdiag] + [gcn_shift | down_shift] )
#   y1   = z[:, :V*O]   (GCN branch, BN+ReLU folded)
#   dwn  = z[:, V*O:]   (down branch, BN+ReLU folded)
#   y1p  = zero-pad y1 in time (VMEM scratch, no HBM pad pass)
#   tcn  = relu( concat_k(y1p[k:k+T]) @ W2_stacked + tcn_shift )   (single matmul)
#   out  = tcn + dwn
# ----------------------------------------------------------------------------
def fused_kernel(T, V, O, KT, pad,
                 xg_ref, kgd_ref, sgd_ref, w2_ref, tsh_ref,
                 o_ref, yp_ref):
    VO = V * O

    # --- GCN branch + down branch in one MXU pass (lane-dense 2*V*O output) ---
    z = jnp.dot(xg_ref[...], kgd_ref[...], preferred_element_type=jnp.float32)
    z = jnp.maximum(z + sgd_ref[...], 0.0)
    y1 = z[:, :VO]          # relu(BN(gcn(x)))   [T, V*O]
    dwn = z[:, VO:]         # relu(BN(down(x)))  [T, V*O]

    # --- temporal zero-padding lives in VMEM scratch (no HBM round trip) ---
    yp_ref[...] = jnp.zeros((T + 2 * pad, VO), jnp.float32)
    yp_ref[pad:pad + T, :] = y1

    # --- stack the KT taps along lanes -> one K = KT*V*O matmul ---
    stacked = jnp.concatenate(
        [yp_ref[k:k + T, :] for k in range(KT)], axis=1)       # [T, KT*V*O]
    tcn = jnp.dot(stacked, w2_ref[...], preferred_element_type=jnp.float32)
    tcn = jnp.maximum(tcn + tsh_ref[...], 0.0)                  # [T, V*O]

    o_ref[...] = tcn + dwn


def fused_forward(xg, kgd, sgd, w2big, tsh, *, T, V, O, KT, pad):
    N = xg.shape[0]
    VCin = xg.shape[2]
    VO = V * O
    kern = functools.partial(fused_kernel, T, V, O, KT, pad)
    return pl.pallas_call(
        kern,
        out_shape=jax.ShapeDtypeStruct((N, T, VO), jnp.float32),
        grid=(N,),
        in_specs=[
            pl.BlockSpec((None, T, VCin), lambda n: (n, 0, 0)),   # xg per n
            pl.BlockSpec((VCin, 2 * VO), lambda n: (0, 0)),       # [Kg | Wd_bd]
            pl.BlockSpec((1, 2 * VO), lambda n: (0, 0)),          # folded shifts
            pl.BlockSpec((KT * VO, VO), lambda n: (0, 0)),        # stacked W2
            pl.BlockSpec((1, VO), lambda n: (0, 0)),              # tcn shift
        ],
        out_specs=pl.BlockSpec((None, T, VO), lambda n: (n, 0, 0)),
        scratch_shapes=[pltpu.VMEM((T + 2 * pad, VO), jnp.float32)],
        compiler_params=pltpu.CompilerParams(
            dimension_semantics=("parallel",),
            vmem_limit_bytes=32 * 1024 * 1024),
    )(xg, kgd, sgd, w2big, tsh)


# ----------------------------------------------------------------------------
# Full TCN_GCN_unit forward: parameter folding (tiny weights) in plain JAX,
# all per-activation work in the fused Pallas kernel.
# ----------------------------------------------------------------------------
def tcn_gcn_unit_forward(x_nctv, p):
    N, Cin, T, V = x_nctv.shape
    O = p["Wg"].shape[1]
    KT = p["W2"].shape[2]
    pad = (KT - 1) // 2

    # channels-last, (v, c)-flattened input rows for the fused GCN/down matmul
    xg = jnp.transpose(x_nctv, (0, 2, 3, 1)).reshape(N, T, V * Cin)

    eyeV = jnp.eye(V, dtype=jnp.float32)

    # ---- fold GCN (A (x) W) + BN into one weight + shift ----
    scale_g = p["gamma_g"] / jnp.sqrt(p["var_g"] + EPS)
    shift_g = p["beta_g"] - p["mean_g"] * scale_g
    Kg = jnp.einsum("iuv,ioc,o->ucvo", p["A"], p["Wg"],
                    scale_g).reshape(V * Cin, V * O)
    gsh = jnp.tile(jnp.sum(p["bg"], axis=0) * scale_g + shift_g, V)

    # ---- fold down branch (1x1 conv + BN), block-diagonal over V ----
    scale_d = p["gamma_d"] / jnp.sqrt(p["var_d"] + EPS)
    shift_d = p["beta_d"] - p["mean_d"] * scale_d
    Wdbd = jnp.einsum("uv,oc,o->ucvo", eyeV, p["Wd"],
                      scale_d).reshape(V * Cin, V * O)
    dsh = jnp.tile(p["bd"] * scale_d + shift_d, V)

    kgd = jnp.concatenate([Kg, Wdbd], axis=1)            # [V*Cin, 2*V*O]
    sgd = jnp.concatenate([gsh, dsh])[None, :]           # [1, 2*V*O]

    # ---- fold temporal conv (k=KT) + BN, taps stacked, block-diag over V ----
    scale_t = p["gamma_t"] / jnp.sqrt(p["var_t"] + EPS)
    shift_t = p["beta_t"] - p["mean_t"] * scale_t
    W2big = jnp.einsum("uv,ock,o->kucvo", eyeV, p["W2"],
                       scale_t).reshape(KT * V * O, V * O)
    tsh = jnp.tile(p["b2"] * scale_t + shift_t, V)[None, :]

    out_tvo = fused_forward(xg, kgd, sgd, W2big, tsh,
                            T=T, V=V, O=O, KT=KT, pad=pad)
    # (N, T, V*O) -> (N, T, V, O) is a free reshape; final NCHW permute is one
    # small wrapper pass (a channels-first kernel output would need an in-kernel
    # (t,(v,o)) -> (o,(t,v)) relayout -- see TODO above).
    return jnp.transpose(out_tvo.reshape(N, T, V, O), (0, 3, 1, 2))


# ----------------------------------------------------------------------------
# Pure-JAX reference (mirrors the PyTorch forward, eval mode)
# ----------------------------------------------------------------------------
def reference_forward(x, p):
    def bn(z, g, b, m, v):
        return g[None, :, None, None] * (z - m[None, :, None, None]) \
            / jnp.sqrt(v[None, :, None, None] + EPS) + b[None, :, None, None]

    # unit_gcn
    y = 0.0
    for i in range(p["A"].shape[0]):
        xa = jnp.einsum("nctu,uv->nctv", x, p["A"][i])
        y = y + jnp.einsum("nctv,oc->notv", xa, p["Wg"][i]) \
            + p["bg"][i][None, :, None, None]
    y = jnp.maximum(bn(y, p["gamma_g"], p["beta_g"], p["mean_g"], p["var_g"]), 0.0)

    # Unit2D (temporal conv k=9, pad 4)
    T = x.shape[2]
    KT = p["W2"].shape[2]
    ypad = jnp.pad(y, ((0, 0), (0, 0), ((KT - 1) // 2, (KT - 1) // 2), (0, 0)))
    z = 0.0
    for k in range(KT):
        z = z + jnp.einsum("nctv,oc->notv", ypad[:, :, k:k + T, :], p["W2"][:, :, k])
    z = z + p["b2"][None, :, None, None]
    z = jnp.maximum(bn(z, p["gamma_t"], p["beta_t"], p["mean_t"], p["var_t"]), 0.0)

    # down1 (Unit2D, k=1)
    d = jnp.einsum("nctv,oc->notv", x, p["Wd"]) + p["bd"][None, :, None, None]
    d = jnp.maximum(bn(d, p["gamma_d"], p["beta_d"], p["mean_d"], p["var_d"]), 0.0)
    return z + d


# ----------------------------------------------------------------------------
def make_params(key, num_A, Cin, O, V, KT):
    ks = jax.random.split(key, 24)
    n = iter(range(24))
    p = {}
    p["A"] = jax.nn.softmax(jax.random.normal(ks[next(n)], (num_A, V, V)), axis=-1)
    p["Wg"] = 0.2 * jax.random.normal(ks[next(n)], (num_A, O, Cin))
    p["bg"] = 0.1 * jax.random.normal(ks[next(n)], (num_A, O))
    p["gamma_g"] = 1.0 + 0.1 * jax.random.normal(ks[next(n)], (O,))
    p["beta_g"] = 0.1 * jax.random.normal(ks[next(n)], (O,))
    p["mean_g"] = 0.1 * jax.random.normal(ks[next(n)], (O,))
    p["var_g"] = 0.9 + 0.2 * jax.random.uniform(ks[next(n)], (O,))
    p["W2"] = 0.1 * jax.random.normal(ks[next(n)], (O, O, KT))
    p["b2"] = 0.1 * jax.random.normal(ks[next(n)], (O,))
    p["gamma_t"] = 1.0 + 0.1 * jax.random.normal(ks[next(n)], (O,))
    p["beta_t"] = 0.1 * jax.random.normal(ks[next(n)], (O,))
    p["mean_t"] = 0.1 * jax.random.normal(ks[next(n)], (O,))
    p["var_t"] = 0.9 + 0.2 * jax.random.uniform(ks[next(n)], (O,))
    p["Wd"] = 0.2 * jax.random.normal(ks[next(n)], (O, Cin))
    p["bd"] = 0.1 * jax.random.normal(ks[next(n)], (O,))
    p["gamma_d"] = 1.0 + 0.1 * jax.random.normal(ks[next(n)], (O,))
    p["beta_d"] = 0.1 * jax.random.normal(ks[next(n)], (O,))
    p["mean_d"] = 0.1 * jax.random.normal(ks[next(n)], (O,))
    p["var_d"] = 0.9 + 0.2 * jax.random.uniform(ks[next(n)], (O,))
    return {k: v.astype(jnp.float32) for k, v in p.items()}


if __name__ == "__main__":
    N, Cin, T, V = 2, 4, 16, 16      # small shapes; V = num_point
    O = 8                            # out_channel (!= in_channel -> down1 used)
    num_A, KT = 3, 9                 # adjacency subsets, temporal kernel size

    key = jax.random.PRNGKey(0)
    kx, kp = jax.random.split(key)
    x = jax.random.normal(kx, (N, Cin, T, V), dtype=jnp.float32)
    params = make_params(kp, num_A, Cin, O, V, KT)

    out = jax.jit(tcn_gcn_unit_forward)(x, params)
    out = jax.block_until_ready(out)

    ref = reference_forward(x, params)
    assert out.shape == (N, O, T, V)
    err = float(jnp.max(jnp.abs(out - ref)))
    assert jnp.allclose(out, ref, rtol=1e-4, atol=1e-4), err
    print("KERNEL_OK")
</pallas_src>

<mosaic_0001>
module attributes {stable_mosaic.version = 11 : i64} {
  func.func @fused_kernel(%arg0: i32, %arg1: memref<1x16x64xf32, #tpu.memory_space<vmem>>, %arg2: memref<64x256xf32, #tpu.memory_space<vmem>>, %arg3: memref<1x256xf32, #tpu.memory_space<vmem>>, %arg4: memref<1152x128xf32, #tpu.memory_space<vmem>>, %arg5: memref<1x128xf32, #tpu.memory_space<vmem>>, %arg6: memref<1x16x128xf32, #tpu.memory_space<vmem>>, %arg7: memref<24x128xf32, #tpu.memory_space<vmem>>) attributes {dimension_semantics = [#tpu.dimension_semantics<parallel>], iteration_bounds = array<i64: 2>, scalar_prefetch = 0 : i64, scratch_operands = 1 : i64, tpu.core_type = #tpu.core_type<tc>, window_params = [{transform_indices = @transform_0, window_bounds = array<i64: 1, 16, 64>}, {pipeline_mode = #tpu.pipeline_mode<synchronous>, transform_indices = @transform_1, window_bounds = array<i64: 64, 256>}, {pipeline_mode = #tpu.pipeline_mode<synchronous>, transform_indices = @transform_2, window_bounds = array<i64: 1, 256>}, {pipeline_mode = #tpu.pipeline_mode<synchronous>, transform_indices = @transform_3, window_bounds = array<i64: 1152, 128>}, {pipeline_mode = #tpu.pipeline_mode<synchronous>, transform_indices = @transform_4, window_bounds = array<i64: 1, 128>}, {transform_indices = @transform_5, window_bounds = array<i64: 1, 16, 128>}]} {
    %c0 = arith.constant 0 : index
    %c0_0 = arith.constant 0 : index
    %c0_1 = arith.constant 0 : index
    %0 = vector.load %arg1[%c0, %c0_0, %c0_1] : memref<1x16x64xf32, #tpu.memory_space<vmem>>, vector<1x16x64xf32>
    %1 = vector.shape_cast %0 : vector<1x16x64xf32> to vector<16x64xf32>
    %c0_2 = arith.constant 0 : index
    %c0_3 = arith.constant 0 : index
    %2 = vector.load %arg2[%c0_2, %c0_3] : memref<64x256xf32, #tpu.memory_space<vmem>>, vector<64x256xf32>
    %cst = arith.constant dense<0.000000e+00> : vector<16x256xf32>
    %3 = tpu.matmul %1, %2, %cst {dimension_numbers = #tpu.dot_dimension_numbers<[1], [0], [0], [1], [0, 0, 1, 1], [], []>} : vector<16x64xf32>, vector<64x256xf32>, vector<16x256xf32> -> vector<16x256xf32>
    %c0_4 = arith.constant 0 : index
    %c0_5 = arith.constant 0 : index
    %4 = vector.load %arg3[%c0_4, %c0_5] : memref<1x256xf32, #tpu.memory_space<vmem>>, vector<1x256xf32>
    %5 = vector.broadcast %4 : vector<1x256xf32> to vector<16x256xf32>
    %6 = arith.addf %3, %5 : vector<16x256xf32>
    %cst_6 = arith.constant 0.000000e+00 : f32
    %7 = vector.broadcast %cst_6 : f32 to vector<16x256xf32>
    %8 = arith.maximumf %6, %7 : vector<16x256xf32>
    %9 = vector.extract_strided_slice %8 {offsets = [0, 0], sizes = [16, 128], strides = [1, 1]} : vector<16x256xf32> to vector<16x128xf32>
    %10 = vector.extract_strided_slice %8 {offsets = [0, 128], sizes = [16, 128], strides = [1, 1]} : vector<16x256xf32> to vector<16x128xf32>
    %cst_7 = arith.constant 0.000000e+00 : f32
    %11 = vector.broadcast %cst_7 : f32 to vector<24x128xf32>
    %c0_8 = arith.constant 0 : index
    %c0_9 = arith.constant 0 : index
    %12 = vector.load %arg7[%c0_8, %c0_9] : memref<24x128xf32, #tpu.memory_space<vmem>>, vector<24x128xf32>
    tpu.vector_store %arg7[%c0_8, %c0_9], %11 {strides = array<i32>} : memref<24x128xf32, #tpu.memory_space<vmem>>, vector<24x128xf32>,
    %c4 = arith.constant 4 : index
    %c0_10 = arith.constant 0 : index
    %13 = vector.load %arg7[%c4, %c0_10] : memref<24x128xf32, #tpu.memory_space<vmem>>, vector<16x128xf32>
    tpu.vector_store %arg7[%c4, %c0_10], %9 {strides = array<i32>} : memref<24x128xf32, #tpu.memory_space<vmem>>, vector<16x128xf32>,
    %c0_11 = arith.constant 0 : index
    %c0_12 = arith.constant 0 : index
    %14 = vector.load %arg7[%c0_11, %c0_12] : memref<24x128xf32, #tpu.memory_space<vmem>>, vector<16x128xf32>
    %c1 = arith.constant 1 : index
    %c0_13 = arith.constant 0 : index
    %15 = vector.load %arg7[%c1, %c0_13] : memref<24x128xf32, #tpu.memory_space<vmem>>, vector<16x128xf32>
    %c2 = arith.constant 2 : index
    %c0_14 = arith.constant 0 : index
    %16 = vector.load %arg7[%c2, %c0_14] : memref<24x128xf32, #tpu.memory_space<vmem>>, vector<16x128xf32>
    %c3 = arith.constant 3 : index
    %c0_15 = arith.constant 0 : index
    %17 = vector.load %arg7[%c3, %c0_15] : memref<24x128xf32, #tpu.memory_space<vmem>>, vector<16x128xf32>
    %c4_16 = arith.constant 4 : index
    %c0_17 = arith.constant 0 : index
    %18 = vector.load %arg7[%c4_16, %c0_17] : memref<24x128xf32, #tpu.memory_space<vmem>>, vector<16x128xf32>
    %c5 = arith.constant 5 : index
    %c0_18 = arith.constant 0 : index
    %19 = vector.load %arg7[%c5, %c0_18] : memref<24x128xf32, #tpu.memory_space<vmem>>, vector<16x128xf32>
    %c6 = arith.constant 6 : index
    %c0_19 = arith.constant 0 : index
    %20 = vector.load %arg7[%c6, %c0_19] : memref<24x128xf32, #tpu.memory_space<vmem>>, vector<16x128xf32>
    %c7 = arith.constant 7 : index
    %c0_20 = arith.constant 0 : index
    %21 = vector.load %arg7[%c7, %c0_20] : memref<24x128xf32, #tpu.memory_space<vmem>>, vector<16x128xf32>
    %c8 = arith.constant 8 : index
    %c0_21 = arith.constant 0 : index
    %22 = vector.load %arg7[%c8, %c0_21] : memref<24x128xf32, #tpu.memory_space<vmem>>, vector<16x128xf32>
    %23 = tpu.concatenate %14, %15, %16, %17, %18, %19, %20, %21, %22 in 1 : vector<16x128xf32>, vector<16x128xf32>, vector<16x128xf32>, vector<16x128xf32>, vector<16x128xf32>, vector<16x128xf32>, vector<16x128xf32>, vector<16x128xf32>, vector<16x128xf32> -> vector<16x1152xf32>
    %c0_22 = arith.constant 0 : index
    %c0_23 = arith.constant 0 : index
    %24 = vector.load %arg4[%c0_22, %c0_23] : memref<1152x128xf32, #tpu.memory_space<vmem>>, vector<1152x128xf32>
    %cst_24 = arith.constant dense<0.000000e+00> : vector<16x128xf32>
    %25 = tpu.matmul %23, %24, %cst_24 {dimension_numbers = #tpu.dot_dimension_numbers<[1], [0], [0], [1], [0, 0, 1, 1], [], []>} : vector<16x1152xf32>, vector<1152x128xf32>, vector<16x128xf32> -> vector<16x128xf32>
    %c0_25 = arith.constant 0 : index
    %c0_26 = arith.constant 0 : index
    %26 = vector.load %arg5[%c0_25, %c0_26] : memref<1x128xf32, #tpu.memory_space<vmem>>, vector<1x128xf32>
    %27 = vector.broadcast %26 : vector<1x128xf32> to vector<16x128xf32>
    %28 = arith.addf %25, %27 : vector<16x128xf32>
    %cst_27 = arith.constant 0.000000e+00 : f32
    %29 = vector.broadcast %cst_27 : f32 to vector<16x128xf32>
    %30 = arith.maximumf %28, %29 : vector<16x128xf32>
    %31 = arith.addf %30, %10 : vector<16x128xf32>
    %c0_28 = arith.constant 0 : index
    %c0_29 = arith.constant 0 : index
    %c0_30 = arith.constant 0 : index
    %32 = vector.load %arg6[%c0_28, %c0_29, %c0_30] : memref<1x16x128xf32, #tpu.memory_space<vmem>>, vector<1x16x128xf32>
    %33 = vector.shape_cast %32 : vector<1x16x128xf32> to vector<16x128xf32>
    %34 = vector.shape_cast %31 : vector<16x128xf32> to vector<1x16x128xf32>
    tpu.vector_store %arg6[%c0_28, %c0_29, %c0_30], %34 {strides = array<i32>} : memref<1x16x128xf32, #tpu.memory_space<vmem>>, vector<1x16x128xf32>,
    return
  }
  func.func @transform_0(%arg0: i32) -> (i32, i32, i32) {
    %c0_i32 = arith.constant 0 : i32
    %c0_i32_0 = arith.constant 0 : i32
    %c0_i32_1 = arith.constant 0 : i32
    return %arg0, %c0_i32, %c0_i32_0 : i32, i32, i32
  }
  func.func @transform_1(%arg0: i32) -> (i32, i32) {
    %c0_i32 = arith.constant 0 : i32
    %c0_i32_0 = arith.constant 0 : i32
    %c0_i32_1 = arith.constant 0 : i32
    return %c0_i32, %c0_i32_0 : i32, i32
  }
  func.func @transform_2(%arg0: i32) -> (i32, i32) {
    %c0_i32 = arith.constant 0 : i32
    %c0_i32_0 = arith.constant 0 : i32
    %c0_i32_1 = arith.constant 0 : i32
    return %c0_i32, %c0_i32_0 : i32, i32
  }
  func.func @transform_3(%arg0: i32) -> (i32, i32) {
    %c0_i32 = arith.constant 0 : i32
    %c0_i32_0 = arith.constant 0 : i32
    %c0_i32_1 = arith.constant 0 : i32
    return %c0_i32, %c0_i32_0 : i32, i32
  }
  func.func @transform_4(%arg0: i32) -> (i32, i32) {
    %c0_i32 = arith.constant 0 : i32
    %c0_i32_0 = arith.constant 0 : i32
    %c0_i32_1 = arith.constant 0 : i32
    return %c0_i32, %c0_i32_0 : i32, i32
  }
  func.func @transform_5(%arg0: i32) -> (i32, i32, i32) {
    %c0_i32 = arith.constant 0 : i32
    %c0_i32_0 = arith.constant 0 : i32
    %c0_i32_1 = arith.constant 0 : i32
    return %arg0, %c0_i32, %c0_i32_0 : i32, i32, i32
  }
}

</mosaic_0001>

<llo_original>
// kernel: tile.18
$region0: #{tile.18}
  #allocation0 [shape = 's32[1]{0}', space=sflag, size = 0x4, scoped, tag = 'scoped memory for tile.18']
  %s0 = inlined_call_operand.vmem [shape: f32[8], index: 0, kind: input, shape index: {}]
  %s1 = inlined_call_operand.vmem [shape: f32[16,8], index: 1, kind: output, shape index: {}]
  // Predicated region
  $region2: #{tile.18} parent=0 // pred_check
    _
  $region3: #{tile.18} parent=0 // pred_check_branch
    %3 = sbr.rel (0) target = $region5
  $region4: #{tile.18} parent=0 // pred_region
    _
  $region5: #{tile.18} parent=0 // pred_fallthru
    _
  %v4 = vld [vmem:[%s0] ss:$0 sm:$0xff]
  %5 = vst [vmem:[%s1] sm:$0xff] %v4
  %s6 = scalar_lea.vmem %s1, 8
  %7 = vst [vmem:[%s6] sm:$0xff] %v4

// kernel: tile.19
$region0: #{tile.19}
  %s0 = inlined_call_operand.vmem [shape: f32[16,8], index: 0, kind: input, shape index: {}]
  %s1 = inlined_call_operand.vmem [shape: f32[128], index: 1, kind: output, shape index: {}]
  $region1: #{tile.19} parent=0
    #allocation0 [shape = 'u8[4096]{0}', space=vmem, size = 0x1000, scoped, tag = 'scoped mem for output reshape']
    %v2 = vld [vmem:[%s0] sm:$0x1]
    %vm3 = vcmask 64512
    %4 = vst.msk [vmem:[#allocation0] sm:$0x1] %vm3, %v2
    %s5 = scalar_lea.vmem %s0, 15
    %v6 = vld [vmem:[%s5] sm:$0x1]
    %7 = vrot.lane.b32.xlu0 %v6, 120
    %v8 = vpop.permute.xlu0 %7
    %vm9 = vcmask 1048512
    %10 = vst.msk [vmem:[#allocation0] sm:$0x1] %vm9, %v8
    %s11 = scalar_lea.vmem %s0, 14
    %v12 = vld [vmem:[%s11] sm:$0x1]
    %13 = vrot.lane.b32.xlu0 %v12, 112
    %v14 = vpop.permute.xlu0 %13
    %vm15 = vcmask 982912
    %16 = vst.msk [vmem:[#allocation0] sm:$0x1] %vm15, %v14
    %s17 = scalar_lea.vmem %s0, 13
    %v18 = vld [vmem:[%s17] sm:$0x1]
    %19 = vrot.lane.b32.xlu0 %v18, 104
    %v20 = vpop.permute.xlu0 %19
    %vm21 = vcmask 917312
    %22 = vst.msk [vmem:[#allocation0] sm:$0x1] %vm21, %v20
    %s23 = scalar_lea.vmem %s0, 12
    %v24 = vld [vmem:[%s23] sm:$0x1]
    %25 = vrot.lane.b32.xlu0 %v24, 96
    %v26 = vpop.permute.xlu0 %25
    %vm27 = vcmask 851712
    %28 = vst.msk [vmem:[#allocation0] sm:$0x1] %vm27, %v26
    %s29 = scalar_lea.vmem %s0, 11
    %v30 = vld [vmem:[%s29] sm:$0x1]
    %31 = vrot.lane.b32.xlu0 %v30, 88
    %v32 = vpop.permute.xlu0 %31
    %vm33 = vcmask 786112
    %34 = vst.msk [vmem:[#allocation0] sm:$0x1] %vm33, %v32
    %s35 = scalar_lea.vmem %s0, 10
    %v36 = vld [vmem:[%s35] sm:$0x1]
    %37 = vrot.lane.b32.xlu0 %v36, 80
    %v38 = vpop.permute.xlu0 %37
    %vm39 = vcmask 720512
    %40 = vst.msk [vmem:[#allocation0] sm:$0x1] %vm39, %v38
    %s41 = scalar_lea.vmem %s0, 9
    %v42 = vld [vmem:[%s41] sm:$0x1]
    %43 = vrot.lane.b32.xlu0 %v42, 72
    %v44 = vpop.permute.xlu0 %43
    %vm45 = vcmask 654912
    %46 = vst.msk [vmem:[#allocation0] sm:$0x1] %vm45, %v44
    %s47 = scalar_lea.vmem %s0, 8
    %v48 = vld [vmem:[%s47] sm:$0x1]
    %49 = vrot.lane.b32.xlu0 %v48, 64
    %v50 = vpop.permute.xlu0 %49
    %vm51 = vcmask 589312
    %52 = vst.msk [vmem:[#allocation0] sm:$0x1] %vm51, %v50
    %s53 = scalar_lea.vmem %s0, 7
    %v54 = vld [vmem:[%s53] sm:$0x1]
    %55 = vrot.lane.b32.xlu0 %v54, 56
    %v56 = vpop.permute.xlu0 %55
    %vm57 = vcmask 523712
    %58 = vst.msk [vmem:[#allocation0] sm:$0x1] %vm57, %v56
    %s59 = scalar_lea.vmem %s0, 6
    %v60 = vld [vmem:[%s59] sm:$0x1]
    %61 = vrot.lane.b32.xlu0 %v60, 48
    %v62 = vpop.permute.xlu0 %61
    %vm63 = vcmask 458112
    %64 = vst.msk [vmem:[#allocation0] sm:$0x1] %vm63, %v62
    %s65 = scalar_lea.vmem %s0, 5
    %v66 = vld [vmem:[%s65] sm:$0x1]
    %67 = vrot.lane.b32.xlu0 %v66, 40
    %v68 = vpop.permute.xlu0 %67
    %vm69 = vcmask 392512
    %70 = vst.msk [vmem:[#allocation0] sm:$0x1] %vm69, %v68
    %s71 = scalar_lea.vmem %s0, 4
    %v72 = vld [vmem:[%s71] sm:$0x1]
    %73 = vrot.lane.b32.xlu0 %v72, 32
    %v74 = vpop.permute.xlu0 %73
    %vm75 = vcmask 326912
    %76 = vst.msk [vmem:[#allocation0] sm:$0x1] %vm75, %v74
    %s77 = scalar_lea.vmem %s0, 3
    %v78 = vld [vmem:[%s77] sm:$0x1]
    %79 = vrot.lane.b32.xlu0 %v78, 24
    %v80 = vpop.permute.xlu0 %79
    %vm81 = vcmask 261312
    %82 = vst.msk [vmem:[#allocation0] sm:$0x1] %vm81, %v80
    %s83 = scalar_lea.vmem %s0, 2
    %v84 = vld [vmem:[%s83] sm:$0x1]
    %85 = vrot.lane.b32.xlu0 %v84, 16
    %v86 = vpop.permute.xlu0 %85
    %vm87 = vcmask 195712
    %88 = vst.msk [vmem:[#allocation0] sm:$0x1] %vm87, %v86
    %s89 = scalar_lea.vmem %s0, 1
    %v90 = vld [vmem:[%s89] sm:$0x1]
    %91 = vrot.lane.b32.xlu0 %v90, 8
    %v92 = vpop.permute.xlu0 %91
    %vm93 = vcmask 130112
    %94 = vst.msk [vmem:[#allocation0] sm:$0x1] %vm93, %v92
    %s96 = sshll.u32 1, 1
    %s97 = ssub.s32 %s96, 1
    %v99 = vld [vmem:[#allocation0] sm:%s97]
    %s100 = sshll.u32 1, 1
    %s101 = ssub.s32 %s100, 1
    %102 = vst [vmem:[%s1] sm:%s101] %v99

// kernel: tile.29
$region0: #{tile.29}
  %s0 = inlined_call_operand.vmem [shape: f32[16,8], index: 0, kind: input, shape index: {}]
  %s1 = inlined_call_operand.vmem [shape: f32[1,128], index: 1, kind: output, shape index: {}]
  $region1: #{tile.29} parent=0
    #allocation0 [shape = 'u8[4096]{0}', space=vmem, size = 0x1000, scoped, tag = 'scoped mem for output reshape']
    %v2 = vld [vmem:[%s0] sm:$0x1]
    %vm3 = vcmask 64512
    %4 = vst.msk [vmem:[#allocation0] sm:$0x1] %vm3, %v2
    %s5 = scalar_lea.vmem %s0, 15
    %v6 = vld [vmem:[%s5] sm:$0x1]
    %7 = vrot.lane.b32.xlu0 %v6, 120
    %v8 = vpop.permute.xlu0 %7
    %vm9 = vcmask 1048512
    %10 = vst.msk [vmem:[#allocation0] sm:$0x1] %vm9, %v8
    %s11 = scalar_lea.vmem %s0, 14
    %v12 = vld [vmem:[%s11] sm:$0x1]
    %13 = vrot.lane.b32.xlu0 %v12, 112
    %v14 = vpop.permute.xlu0 %13
    %vm15 = vcmask 982912
    %16 = vst.msk [vmem:[#allocation0] sm:$0x1] %vm15, %v14
    %s17 = scalar_lea.vmem %s0, 13
    %v18 = vld [vmem:[%s17] sm:$0x1]
    %19 = vrot.lane.b32.xlu0 %v18, 104
    %v20 = vpop.permute.xlu0 %19
    %vm21 = vcmask 917312
    %22 = vst.msk [vmem:[#allocation0] sm:$0x1] %vm21, %v20
    %s23 = scalar_lea.vmem %s0, 12
    %v24 = vld [vmem:[%s23] sm:$0x1]
    %25 = vrot.lane.b32.xlu0 %v24, 96
    %v26 = vpop.permute.xlu0 %25
    %vm27 = vcmask 851712
    %28 = vst.msk [vmem:[#allocation0] sm:$0x1] %vm27, %v26
    %s29 = scalar_lea.vmem %s0, 11
    %v30 = vld [vmem:[%s29] sm:$0x1]
    %31 = vrot.lane.b32.xlu0 %v30, 88
    %v32 = vpop.permute.xlu0 %31
    %vm33 = vcmask 786112
    %34 = vst.msk [vmem:[#allocation0] sm:$0x1] %vm33, %v32
    %s35 = scalar_lea.vmem %s0, 10
    %v36 = vld [vmem:[%s35] sm:$0x1]
    %37 = vrot.lane.b32.xlu0 %v36, 80
    %v38 = vpop.permute.xlu0 %37
    %vm39 = vcmask 720512
    %40 = vst.msk [vmem:[#allocation0] sm:$0x1] %vm39, %v38
    %s41 = scalar_lea.vmem %s0, 9
    %v42 = vld [vmem:[%s41] sm:$0x1]
    %43 = vrot.lane.b32.xlu0 %v42, 72
    %v44 = vpop.permute.xlu0 %43
    %vm45 = vcmask 654912
    %46 = vst.msk [vmem:[#allocation0] sm:$0x1] %vm45, %v44
    %s47 = scalar_lea.vmem %s0, 8
    %v48 = vld [vmem:[%s47] sm:$0x1]
    %49 = vrot.lane.b32.xlu0 %v48, 64
    %v50 = vpop.permute.xlu0 %49
    %vm51 = vcmask 589312
    %52 = vst.msk [vmem:[#allocation0] sm:$0x1] %vm51, %v50
    %s53 = scalar_lea.vmem %s0, 7
    %v54 = vld [vmem:[%s53] sm:$0x1]
    %55 = vrot.lane.b32.xlu0 %v54, 56
    %v56 = vpop.permute.xlu0 %55
    %vm57 = vcmask 523712
    %58 = vst.msk [vmem:[#allocation0] sm:$0x1] %vm57, %v56
    %s59 = scalar_lea.vmem %s0, 6
    %v60 = vld [vmem:[%s59] sm:$0x1]
    %61 = vrot.lane.b32.xlu0 %v60, 48
    %v62 = vpop.permute.xlu0 %61
    %vm63 = vcmask 458112
    %64 = vst.msk [vmem:[#allocation0] sm:$0x1] %vm63, %v62
    %s65 = scalar_lea.vmem %s0, 5
    %v66 = vld [vmem:[%s65] sm:$0x1]
    %67 = vrot.lane.b32.xlu0 %v66, 40
    %v68 = vpop.permute.xlu0 %67
    %vm69 = vcmask 392512
    %70 = vst.msk [vmem:[#allocation0] sm:$0x1] %vm69, %v68
    %s71 = scalar_lea.vmem %s0, 4
    %v72 = vld [vmem:[%s71] sm:$0x1]
    %73 = vrot.lane.b32.xlu0 %v72, 32
    %v74 = vpop.permute.xlu0 %73
    %vm75 = vcmask 326912
    %76 = vst.msk [vmem:[#allocation0] sm:$0x1] %vm75, %v74
    %s77 = scalar_lea.vmem %s0, 3
    %v78 = vld [vmem:[%s77] sm:$0x1]
    %79 = vrot.lane.b32.xlu0 %v78, 24
    %v80 = vpop.permute.xlu0 %79
    %vm81 = vcmask 261312
    %82 = vst.msk [vmem:[#allocation0] sm:$0x1] %vm81, %v80
    %s83 = scalar_lea.vmem %s0, 2
    %v84 = vld [vmem:[%s83] sm:$0x1]
    %85 = vrot.lane.b32.xlu0 %v84, 16
    %v86 = vpop.permute.xlu0 %85
    %vm87 = vcmask 195712
    %88 = vst.msk [vmem:[#allocation0] sm:$0x1] %vm87, %v86
    %s89 = scalar_lea.vmem %s0, 1
    %v90 = vld [vmem:[%s89] sm:$0x1]
    %91 = vrot.lane.b32.xlu0 %v90, 8
    %v92 = vpop.permute.xlu0 %91
    %vm93 = vcmask 130112
    %94 = vst.msk [vmem:[#allocation0] sm:$0x1] %vm93, %v92
    %s96 = sshll.u32 1, 1
    %s97 = ssub.s32 %s96, 1
    %v99 = vld [vmem:[#allocation0] sm:%s97]
    %s100 = sshll.u32 1, 1
    %s101 = ssub.s32 %s100, 1
    %102 = vst [vmem:[%s1] sm:%s101] %v99

// kernel: tcn_gcn_unit_forward.1
$region0: #{tcn_gcn_unit_forward.1}
  #allocation0 [shape = 'u32[]', space=smem, size = 0x4, offset = 0x4, fixed_abs, tag = 'smem constant byte address 0x4 - core index']
  #allocation1 [shape = 'u32[144,128]{1,0:T(1,128)}', space=vmem, size = 0x12000, scoped, tag = 'internal scratch']
  #allocation2 [shape = 'f32[24,128]{1,0:T(8,128)}', space=vmem, size = 0x3000, scoped, tag = 'scratch operand']
  %s0 = inlined_call_operand.vmem [shape: f32[2,16,64], index: 0, kind: input, shape index: {}]
  %s1 = inlined_call_operand.vmem [shape: f32[64,256], index: 1, kind: input, shape index: {}]
  %s2 = inlined_call_operand.vmem [shape: f32[1,256], index: 2, kind: input, shape index: {}]
  %s3 = inlined_call_operand.vmem [shape: f32[1152,128], index: 3, kind: input, shape index: {}]
  %s4 = inlined_call_operand.vmem [shape: f32[1,128], index: 4, kind: input, shape index: {}]
  %s5 = inlined_call_operand.vmem [shape: f32[2,16,128], index: 5, kind: output, shape index: {}]
  %s6 = sld [smem:[#allocation0]]
  $region53: #{tcn_gcn_unit_forward.1} parent=0
    _
  %s8 = ssub.s32 1, %s6
  %s9 = scalar_select 0, %s8, %s6
  loop: start=0, step=1, limit=4
  $region2: #{tcn_gcn_unit_forward.1} parent=0 // loop_pre_header
    _
  $region3: #{tcn_gcn_unit_forward.1} parent=0 // loop_header
    %s11 = sphi 0, %s15
    %p12 = scmp.ge.s32.totalorder %s11, 4
    %s21 = sphi 0, %s23
    %s24 = sphi 0, %s21
    %s25 = sphi 0, %s24
    %s41 = sphi 0, %s25
    %s45 = sphi 0, %s45
    %s47 = sphi 0, %s45
    %s48 = sphi 0, %s47
    %s62 = sphi 0, %s48
    %s66 = sphi 0, %s66
    %s68 = sphi 0, %s66
    %s69 = sphi 0, %s68
    %s83 = sphi 0, %s69
    %s87 = sphi 0, %s87
    %s89 = sphi 0, %s87
    %s90 = sphi 0, %s89
    %s104 = sphi 0, %s90
    %s108 = sphi 0, %s108
    %s110 = sphi 0, %s108
    %s111 = sphi 0, %s110
    %s125 = sphi 0, %s111
    %s131 = sphi 0, %s133
    %s134 = sphi 0, %s131
    %s135 = sphi 0, %s134
    %s151 = sphi 0, %s135
  $region4: #{tcn_gcn_unit_forward.1} parent=0 // loop_header_branch
    %14 = sbr.rel (%p12) target = $region8
  $region5: #{tcn_gcn_unit_forward.1} parent=0 // loop_body
    %s16 = ssub.s32 %s11, 1
    %s17 = ssub.s32 %s11, 2
    %s18 = sadd.s32 %s11, 1
    %s19 = ssub.s32 %s11, %s18
    %p20 = scmp.eq.s32.totalorder %s19, 0
    %s22 = sadd.s32 %s21, 1
    %s23 = scalar_select %p20, %s21, %s22
    %p26 = pneg %p20
    %p27 = scmp.eq.s32.totalorder %s11, 1
    %p28 = por %p26, %p27
    %p29 = scmp.ne.s32.totalorder %s21, %s24
    %p30 = scmp.eq.s32.totalorder %s11, 0
    %p31 = por %p29, %p30
    %p32 = scmp.ne.s32.totalorder %s21, %s24
    %p33 = scmp.eq.s32.totalorder %s16, 1
    %p34 = por %p32, %p33
    %p35 = scmp.ne.s32.totalorder %s24, %s25
    %p36 = scmp.eq.s32.totalorder %s16, 0
    %p37 = por %p35, %p36
    %p38 = scmp.ne.s32.totalorder %s24, %s25
    %p39 = scmp.eq.s32.totalorder %s17, 1
    %p40 = por %p38, %p39
    %p42 = scmp.ne.s32.totalorder %s25, %s41
    %p43 = scmp.eq.s32.totalorder %s17, 0
    %p44 = por %p42, %p43
    %s46 = sadd.s32 %s45, 1
    %p49 = scmp.eq.s32.totalorder %s11, 1
    %p50 = scmp.ne.s32.totalorder %s45, %s47
    %p51 = scmp.eq.s32.totalorder %s11, 0
    %p52 = por %p50, %p51
    %p53 = scmp.ne.s32.totalorder %s45, %s47
    %p54 = scmp.eq.s32.totalorder %s16, 1
    %p55 = por %p53, %p54
    %p56 = scmp.ne.s32.totalorder %s47, %s48
    %p57 = scmp.eq.s32.totalorder %s16, 0
    %p58 = por %p56, %p57
    %p59 = scmp.ne.s32.totalorder %s47, %s48
    %p60 = scmp.eq.s32.totalorder %s17, 1
    %p61 = por %p59, %p60
    %p63 = scmp.ne.s32.totalorder %s48, %s62
    %p64 = scmp.eq.s32.totalorder %s17, 0
    %p65 = por %p63, %p64
    %s67 = sadd.s32 %s66, 1
    %p70 = scmp.eq.s32.totalorder %s11, 1
    %p71 = scmp.ne.s32.totalorder %s66, %s68
    %p72 = scmp.eq.s32.totalorder %s11, 0
    %p73 = por %p71, %p72
    %p74 = scmp.ne.s32.totalorder %s66, %s68
    %p75 = scmp.eq.s32.totalorder %s16, 1
    %p76 = por %p74, %p75
    %p77 = scmp.ne.s32.totalorder %s68, %s69
    %p78 = scmp.eq.s32.totalorder %s16, 0
    %p79 = por %p77, %p78
    %p80 = scmp.ne.s32.totalorder %s68, %s69
    %p81 = scmp.eq.s32.totalorder %s17, 1
    %p82 = por %p80, %p81
    %p84 = scmp.ne.s32.totalorder %s69, %s83
    %p85 = scmp.eq.s32.totalorder %s17, 0
    %p86 = por %p84, %p85
    %s88 = sadd.s32 %s87, 1
    %p91 = scmp.eq.s32.totalorder %s11, 1
    %p92 = scmp.ne.s32.totalorder %s87, %s89
    %p93 = scmp.eq.s32.totalorder %s11, 0
    %p94 = por %p92, %p93
    %p95 = scmp.ne.s32.totalorder %s87, %s89
    %p96 = scmp.eq.s32.totalorder %s16, 1
    %p97 = por %p95, %p96
    %p98 = scmp.ne.s32.totalorder %s89, %s90
    %p99 = scmp.eq.s32.totalorder %s16, 0
    %p100 = por %p98, %p99
    %p101 = scmp.ne.s32.totalorder %s89, %s90
    %p102 = scmp.eq.s32.totalorder %s17, 1
    %p103 = por %p101, %p102
    %p105 = scmp.ne.s32.totalorder %s90, %s104
    %p106 = scmp.eq.s32.totalorder %s17, 0
    %p107 = por %p105, %p106
    %s109 = sadd.s32 %s108, 1
    %p112 = scmp.eq.s32.totalorder %s11, 1
    %p113 = scmp.ne.s32.totalorder %s108, %s110
    %p114 = scmp.eq.s32.totalorder %s11, 0
    %p115 = por %p113, %p114
    %p116 = scmp.ne.s32.totalorder %s108, %s110
    %p117 = scmp.eq.s32.totalorder %s16, 1
    %p118 = por %p116, %p117
    %p119 = scmp.ne.s32.totalorder %s110, %s111
    %p120 = scmp.eq.s32.totalorder %s16, 0
    %p121 = por %p119, %p120
    %p122 = scmp.ne.s32.totalorder %s110, %s111
    %p123 = scmp.eq.s32.totalorder %s17, 1
    %p124 = por %p122, %p123
    %p126 = scmp.ne.s32.totalorder %s111, %s125
    %p127 = scmp.eq.s32.totalorder %s17, 0
    %p128 = por %p126, %p127
    %s129 = ssub.s32 %s11, %s18
    %p130 = scmp.eq.s32.totalorder %s129, 0
    %s132 = sadd.s32 %s131, 1
    %s133 = scalar_select %p130, %s131, %s132
    %p136 = pneg %p130
    %p137 = scmp.eq.s32.totalorder %s11, 1
    %p138 = por %p136, %p137
    %p139 = scmp.ne.s32.totalorder %s131, %s134
    %p140 = scmp.eq.s32.totalorder %s11, 0
    %p141 = por %p139, %p140
    %p142 = scmp.ne.s32.totalorder %s131, %s134
    %p143 = scmp.eq.s32.totalorder %s16, 1
    %p144 = por %p142, %p143
    %p145 = scmp.ne.s32.totalorder %s134, %s135
    %p146 = scmp.eq.s32.totalorder %s16, 0
    %p147 = por %p145, %p146
    %p148 = scmp.ne.s32.totalorder %s134, %s135
    %p149 = scmp.eq.s32.totalorder %s17, 1
    %p150 = por %p148, %p149
    %p152 = scmp.ne.s32.totalorder %s135, %s151
    %p153 = scmp.eq.s32.totalorder %s17, 0
    %p154 = por %p152, %p153
    %p155 = scmp.le.s32.totalorder 1, %s11
    %p156 = scmp.lt.s32.totalorder %s11, 3
    %p157 = pnand %p155, %p156
    %p158 = pneg %p157
    // Predicated region
    $region9: #{tcn_gcn_unit_forward.1} parent=5 // pred_check
      _
    $region10: #{tcn_gcn_unit_forward.1} parent=5 // pred_check_branch
      %160 = sbr.rel (%p157) target = $region12
    $region11: #{tcn_gcn_unit_forward.1} parent=5 // pred_region
      %s161 = ssub.s32 %s11, 1
      // Predicated region
      $region13: #{tcn_gcn_unit_forward.1} parent=11 // pred_check
        %p162 = pneg %p58
      $region14: #{tcn_gcn_unit_forward.1} parent=11 // pred_check_branch
        %164 = sbr.rel (%p162) target = $region16
      $region15: #{tcn_gcn_unit_forward.1} parent=11 // pred_region
        _
      $region16: #{tcn_gcn_unit_forward.1} parent=11 // pred_fallthru
        _
      // Predicated region
      $region17: #{tcn_gcn_unit_forward.1} parent=11 // pred_check
        %p165 = pneg %p79
      $region18: #{tcn_gcn_unit_forward.1} parent=11 // pred_check_branch
        %167 = sbr.rel (%p165) target = $region20
      $region19: #{tcn_gcn_unit_forward.1} parent=11 // pred_region
        _
      $region20: #{tcn_gcn_unit_forward.1} parent=11 // pred_fallthru
        _
      // Predicated region
      $region21: #{tcn_gcn_unit_forward.1} parent=11 // pred_check
        %p168 = pneg %p100
      $region22: #{tcn_gcn_unit_forward.1} parent=11 // pred_check_branch
        %170 = sbr.rel (%p168) target = $region24
      $region23: #{tcn_gcn_unit_forward.1} parent=11 // pred_region
        _
      $region24: #{tcn_gcn_unit_forward.1} parent=11 // pred_fallthru
        _
      // Predicated region
      $region25: #{tcn_gcn_unit_forward.1} parent=11 // pred_check
        %p171 = pneg %p121
      $region26: #{tcn_gcn_unit_forward.1} parent=11 // pred_check_branch
        %173 = sbr.rel (%p171) target = $region28
      $region27: #{tcn_gcn_unit_forward.1} parent=11 // pred_region
        _
      $region28: #{tcn_gcn_unit_forward.1} parent=11 // pred_fallthru
        _
    $region12: #{tcn_gcn_unit_forward.1} parent=5 // pred_fallthru
      _
    %p174 = scmp.lt.s32.totalorder %s11, 2
    // Predicated region
    $region29: #{tcn_gcn_unit_forward.1} parent=5 // pred_check
      %p175 = pneg %p174
    $region30: #{tcn_gcn_unit_forward.1} parent=5 // pred_check_branch
      %177 = sbr.rel (%p175) target = $region32
    $region31: #{tcn_gcn_unit_forward.1} parent=5 // pred_region
      // Predicated region
      $region33: #{tcn_gcn_unit_forward.1} parent=31 // pred_check
        %p178 = pneg %p31
      $region34: #{tcn_gcn_unit_forward.1} parent=31 // pred_check_branch
        %180 = sbr.rel (%p178) target = $region36
      $region35: #{tcn_gcn_unit_forward.1} parent=31 // pred_region
        %p181 = scmp.lt.s32.totalorder %s11, 1
        %s182 = scalar_select %p181, %s11, 1
        %s183 = smul.addr %s182, 2
        %s184 = smul.addr %s183, 8
        %s185 = scalar_lea.vmem %s0, %s184
      $region36: #{tcn_gcn_unit_forward.1} parent=31 // pred_fallthru
        _
    $region32: #{tcn_gcn_unit_forward.1} parent=5 // pred_fallthru
      _
    %p186 = scmp.le.s32.totalorder 1, %s11
    %p187 = scmp.lt.s32.totalorder %s11, 3
    %p188 = pnand %p186, %p187
    %p189 = pneg %p188
    // Predicated region
    $region37: #{tcn_gcn_unit_forward.1} parent=5 // pred_check
      _
    $region38: #{tcn_gcn_unit_forward.1} parent=5 // pred_check_branch
      %191 = sbr.rel (%p188) target = $region40
    $region39: #{tcn_gcn_unit_forward.1} parent=5 // pred_region
      %s192 = ssub.s32 %s11, 1
      %p193 = scmp.lt.s32.totalorder %s16, 1
      %s194 = scalar_select %p193, %s16, 1
      %s195 = smul.addr %s194, 2
      %s196 = smul.addr %s195, 8
      %s197 = scalar_lea.vmem %s0, %s196
      %p198 = pneg %p37
      %p199 = pneg %p34
      %p200 = pneg %p58
      %p201 = pneg %p55
      %p202 = pneg %p79
      %p203 = pneg %p76
      %p204 = pneg %p100
      %p205 = pneg %p97
      %p206 = pneg %p121
      %p207 = pneg %p118
      %p208 = pneg %p147
      %p209 = pneg %p144
      %p210 = scmp.lt.s32.totalorder %s16, 1
      %s211 = scalar_select %p210, %s16, 1
      %s212 = smul.addr %s211, 2
      %s213 = smul.addr %s212, 8
      %s214 = scalar_lea.vmem %s5, %s213
      %p215 = scmp.lt.s32.totalorder %s16, 1
      %s216 = scalar_select %p215, %s16, 1
      %s217 = smul.addr %s216, 2
      %s218 = smul.addr %s217, 8
      %s219 = scalar_lea.vmem %s0, %s218
      %p220 = scmp.lt.s32.totalorder %s16, 1
      %s221 = scalar_select %p220, %s16, 1
      %s222 = smul.addr %s221, 2
      %s223 = smul.addr %s222, 8
      %s224 = scalar_lea.vmem %s5, %s223
      %v225 = vld [vmem:[%s219] sm:$0xff]
      %v226 = vld [vmem:[%s219 + $0x8] sm:$0xff]
      %v227 = vld [vmem:[%s1] sm:$0xff]
      %v228 = vld [vmem:[%s1 + $0x8] sm:$0xff]
      %v229 = vld [vmem:[%s1 + $0x10] sm:$0xff]
      %v230 = vld [vmem:[%s1 + $0x18] sm:$0xff]
      %v231 = vld [vmem:[%s1 + $0x20] sm:$0xff]
      %v232 = vld [vmem:[%s1 + $0x28] sm:$0xff]
      %v233 = vld [vmem:[%s1 + $0x30] sm:$0xff]
      %v234 = vld [vmem:[%s1 + $0x38] sm:$0xff]
      %v235 = vld [vmem:[%s1 + $0x40] sm:$0xff]
      %v236 = vld [vmem:[%s1 + $0x48] sm:$0xff]
      %v237 = vld [vmem:[%s1 + $0x50] sm:$0xff]
      %v238 = vld [vmem:[%s1 + $0x58] sm:$0xff]
      %v239 = vld [vmem:[%s1 + $0x60] sm:$0xff]
      %v240 = vld [vmem:[%s1 + $0x68] sm:$0xff]
      %v241 = vld [vmem:[%s1 + $0x70] sm:$0xff]
      %v242 = vld [vmem:[%s1 + $0x78] sm:$0xff]
      %v243 = vld [vmem:[%s2] sm:$0x3]
      %v245 = vlaneseq
      %v246 = vshrl.u32 %v245, 7
      %v247 = vsub.s32 0, %v246
      %v248 = vrot.slane %v243, %v247
      %v249 = vlaneseq
      %v250 = vshrl.u32 %v249, 7
      %v251 = vsub.s32 1, %v250
      %v252 = vrot.slane %v243, %v251
      %vm255 = vcmask 523264
      %v257 = vsel %vm255, %v225, 0
      %v260 = vsel %vm255, %v226, 0
      %262 = vmatprep.subr.mxu0 0.0
      %263 = vmatpush1.msra.mxu0 0.0
      %264 = vmatprep.subr.mxu0 0.0
      %265 = vmatpush1.msra.mxu0 0.0
      %266 = vmatprep.subr.mxu0 0.0
      %267 = vmatpush1.msra.mxu0 0.0
      %268 = vmatprep.subr.mxu0 0.0
      %269 = vmatpush1.msra.mxu0 0.0
      %270 = vmatprep.subr.mxu0 0.0
      %271 = vmatpush1.msra.mxu0 0.0
      %272 = vmatprep.subr.mxu0 0.0
      %273 = vmatpush1.msra.mxu0 0.0
      %274 = vmatprep.subr.mxu0 0.0
      %275 = vmatpush1.msra.mxu0 0.0
      %276 = vmatprep.subr.mxu0 0.0
      %277 = vmatpush1.msra.mxu0 0.0
      %278 = vmatprep.subr.mxu0 %v242
      %279 = vmatpush1.msra.mxu0 %v241
      %280 = vmatprep.subr.mxu0 %v240
      %281 = vmatpush1.msra.mxu0 %v239
      %282 = vmatprep.subr.mxu0 %v238
      %283 = vmatpush1.msra.mxu0 %v237
      %284 = vmatprep.subr.mxu0 %v236
      %285 = vmatpush1.msra.mxu0 %v235
      %286 = vmatprep.subr.mxu0 %v234
      %287 = vmatpush1.msra.mxu0 %v233
      %288 = vmatprep.subr.mxu0 %v232
      %289 = vmatpush1.msra.mxu0 %v231
      %290 = vmatprep.subr.mxu0 %v230
      %291 = vmatpush1.msra.mxu0 %v229
      %292 = vmatprep.subr.mxu0 %v228
      %293 = vmatpush1.msra.mxu0 %v227
      %294 = vmatprep.subr.mxu0 0.0
      %295 = vmatpush2.msra.mxu0 0.0
      %296 = vmatprep.subr.mxu0 0.0
      %297 = vmatpush2.msra.mxu0 0.0
      %298 = vmatprep.subr.mxu0 0.0
      %299 = vmatpush2.msra.mxu0 0.0
      %300 = vmatprep.subr.mxu0 0.0
      %301 = vmatpush2.msra.mxu0 0.0
      %302 = vmatprep.subr.mxu0 0.0
      %303 = vmatpush2.msra.mxu0 0.0
      %304 = vmatprep.subr.mxu0 0.0
      %305 = vmatpush2.msra.mxu0 0.0
      %306 = vmatprep.subr.mxu0 0.0
      %307 = vmatpush2.msra.mxu0 0.0
      %308 = vmatprep.subr.mxu0 0.0
      %309 = vmatpush2.msra.mxu0 0.0
      %310 = vmatprep.subr.mxu0 0.0
      %311 = vmatpush2.msra.mxu0 0.0
      %312 = vmatprep.subr.mxu0 0.0
      %313 = vmatpush2.msra.mxu0 0.0
      %314 = vmatprep.subr.mxu0 0.0
      %315 = vmatpush2.msra.mxu0 0.0
      %316 = vmatprep.subr.mxu0 0.0
      %317 = vmatpush2.msra.mxu0 0.0
      %318 = vmatprep.subr.mxu0 0.0
      %319 = vmatpush2.msra.mxu0 0.0
      %320 = vmatprep.subr.mxu0 0.0
      %321 = vmatpush2.msra.mxu0 0.0
      %322 = vmatprep.subr.mxu0 0.0
      %323 = vmatpush2.msra.mxu0 0.0
      %324 = vmatprep.subr.mxu0 0.0
      %325 = vmatpush2.msra.mxu0 0.0
      %326 = vmatprep.mubr.f32.mxu0 0.0
      %327 = vmatmul.mubr.f32.gmra.mxu0 %v257
      %v328 = vpop.f32.mrf.mxu0
      %v329 = vadd.f32 %v248, %v328
      %v330 = vpop.f32.mrf.mxu0
      %v331 = vadd.f32 %v252, %v330
      %332 = vmatprep.mubr.f32.mxu0 0.0
      %333 = vmatmul.mubr.f32.gmra.mxu0 %v260
      %v334 = vpop.f32.mrf.mxu0
      %v335 = vadd.f32 %v248, %v334
      %v336 = vpop.f32.mrf.mxu0
      %v337 = vadd.f32 %v252, %v336
      %338 = vdwg.mxu0
      %v339 = vmax.f32 %v329, 0.0
      %v340 = vmax.f32 %v331, 0.0
      %v341 = vmax.f32 %v335, 0.0
      %v342 = vmax.f32 %v337, 0.0
      %343 = vst [vmem:[#allocation2] sm:$0xff] 0.0
      %344 = vst [vmem:[#allocation2 + $0x8] sm:$0xff] 0.0
      %345 = vst [vmem:[#allocation2 + $0x10] sm:$0xff] 0.0
      %346 = vst [vmem:[#allocation2 + $0x4] sm:$0xff] %v339
      %347 = vst [vmem:[#allocation2 + $0xc] sm:$0xff] %v341
      %v348 = vld [vmem:[#allocation2] sm:$0xff]
      %v349 = vld [vmem:[#allocation2 + $0x8] sm:$0xff]
      %v350 = vld [vmem:[#allocation2 + $0x1] sm:$0xff]
      %v351 = vld [vmem:[#allocation2 + $0x9] sm:$0xff]
      %v352 = vld [vmem:[#allocation2 + $0x2] sm:$0xff]
      %v353 = vld [vmem:[#allocation2 + $0xa] sm:$0xff]
      %v354 = vld [vmem:[#allocation2 + $0x3] sm:$0xff]
      %v355 = vld [vmem:[#allocation2 + $0xb] sm:$0xff]
      %v356 = vld [vmem:[#allocation2 + $0x4] sm:$0xff]
      %v357 = vld [vmem:[#allocation2 + $0xc] sm:$0xff]
      %v358 = vld [vmem:[#allocation2 + $0x5] sm:$0xff]
      %v359 = vld [vmem:[#allocation2 + $0xd] sm:$0xff]
      %v360 = vld [vmem:[#allocation2 + $0x6] sm:$0xff]
      %v361 = vld [vmem:[#allocation2 + $0xe] sm:$0xff]
      %v362 = vld [vmem:[#allocation2 + $0x7] sm:$0xff]
      %v363 = vld [vmem:[#allocation2 + $0xf] sm:$0xff]
      %v364 = vld [vmem:[#allocation2 + $0x8] sm:$0xff]
      %v365 = vld [vmem:[#allocation2 + $0x10] sm:$0xff]
      %v366 = vld [vmem:[%s3] sm:$0xff]
      %v367 = vld [vmem:[%s3 + $0x8] sm:$0xff]
      %v368 = vld [vmem:[%s3 + $0x10] sm:$0xff]
      %v369 = vld [vmem:[%s3 + $0x18] sm:$0xff]
      %v370 = vld [vmem:[%s3 + $0x20] sm:$0xff]
      %v371 = vld [vmem:[%s3 + $0x28] sm:$0xff]
      %v372 = vld [vmem:[%s3 + $0x30] sm:$0xff]
      %v373 = vld [vmem:[%s3 + $0x38] sm:$0xff]
      %v374 = vld [vmem:[%s3 + $0x40] sm:$0xff]
      %v375 = vld [vmem:[%s3 + $0x48] sm:$0xff]
      %v376 = vld [vmem:[%s3 + $0x50] sm:$0xff]
      %v377 = vld [vmem:[%s3 + $0x58] sm:$0xff]
      %v378 = vld [vmem:[%s3 + $0x60] sm:$0xff]
      %v379 = vld [vmem:[%s3 + $0x68] sm:$0xff]
      %v380 = vld [vmem:[%s3 + $0x70] sm:$0xff]
      %v381 = vld [vmem:[%s3 + $0x78] sm:$0xff]
      %v382 = vld [vmem:[%s3 + $0x80] sm:$0xff]
      %v383 = vld [vmem:[%s3 + $0x88] sm:$0xff]
      %v384 = vld [vmem:[%s3 + $0x90] sm:$0xff]
      %v385 = vld [vmem:[%s3 + $0x98] sm:$0xff]
      %v386 = vld [vmem:[%s3 + $0xa0] sm:$0xff]
      %v387 = vld [vmem:[%s3 + $0xa8] sm:$0xff]
      %v388 = vld [vmem:[%s3 + $0xb0] sm:$0xff]
      %v389 = vld [vmem:[%s3 + $0xb8] sm:$0xff]
      %v390 = vld [vmem:[%s3 + $0xc0] sm:$0xff]
      %v391 = vld [vmem:[%s3 + $0xc8] sm:$0xff]
      %v392 = vld [vmem:[%s3 + $0xd0] sm:$0xff]
      %v393 = vld [vmem:[%s3 + $0xd8] sm:$0xff]
      %v394 = vld [vmem:[%s3 + $0xe0] sm:$0xff]
      %v395 = vld [vmem:[%s3 + $0xe8] sm:$0xff]
      %v396 = vld [vmem:[%s3 + $0xf0] sm:$0xff]
      %v397 = vld [vmem:[%s3 + $0xf8] sm:$0xff]
      %v398 = vld [vmem:[%s3 + $0x100] sm:$0xff]
      %v399 = vld [vmem:[%s3 + $0x108] sm:$0xff]
      %v400 = vld [vmem:[%s3 + $0x110] sm:$0xff]
      %v401 = vld [vmem:[%s3 + $0x118] sm:$0xff]
      %v402 = vld [vmem:[%s3 + $0x120] sm:$0xff]
      %v403 = vld [vmem:[%s3 + $0x128] sm:$0xff]
      %v404 = vld [vmem:[%s3 + $0x130] sm:$0xff]
      %v405 = vld [vmem:[%s3 + $0x138] sm:$0xff]
      %v406 = vld [vmem:[%s3 + $0x140] sm:$0xff]
      %v407 = vld [vmem:[%s3 + $0x148] sm:$0xff]
      %v408 = vld [vmem:[%s3 + $0x150] sm:$0xff]
      %v409 = vld [vmem:[%s3 + $0x158] sm:$0xff]
      %v410 = vld [vmem:[%s3 + $0x160] sm:$0xff]
      %v411 = vld [vmem:[%s3 + $0x168] sm:$0xff]
      %v412 = vld [vmem:[%s3 + $0x170] sm:$0xff]
      %v413 = vld [vmem:[%s3 + $0x178] sm:$0xff]
      %v414 = vld [vmem:[%s3 + $0x180] sm:$0xff]
      %v415 = vld [vmem:[%s3 + $0x188] sm:$0xff]
      %v416 = vld [vmem:[%s3 + $0x190] sm:$0xff]
      %v417 = vld [vmem:[%s3 + $0x198] sm:$0xff]
      %v418 = vld [vmem:[%s3 + $0x1a0] sm:$0xff]
      %v419 = vld [vmem:[%s3 + $0x1a8] sm:$0xff]
      %v420 = vld [vmem:[%s3 + $0x1b0] sm:$0xff]
      %v421 = vld [vmem:[%s3 + $0x1b8] sm:$0xff]
      %v422 = vld [vmem:[%s3 + $0x1c0] sm:$0xff]
      %v423 = vld [vmem:[%s3 + $0x1c8] sm:$0xff]
      %v424 = vld [vmem:[%s3 + $0x1d0] sm:$0xff]
      %v425 = vld [vmem:[%s3 + $0x1d8] sm:$0xff]
      %v426 = vld [vmem:[%s3 + $0x1e0] sm:$0xff]
      %v427 = vld [vmem:[%s3 + $0x1e8] sm:$0xff]
      %v428 = vld [vmem:[%s3 + $0x1f0] sm:$0xff]
      %v429 = vld [vmem:[%s3 + $0x1f8] sm:$0xff]
      %v430 = vld [vmem:[%s3 + $0x200] sm:$0xff]
      %v431 = vld [vmem:[%s3 + $0x208] sm:$0xff]
      %v432 = vld [vmem:[%s3 + $0x210] sm:$0xff]
      %v433 = vld [vmem:[%s3 + $0x218] sm:$0xff]
      %v434 = vld [vmem:[%s3 + $0x220] sm:$0xff]
      %v435 = vld [vmem:[%s3 + $0x228] sm:$0xff]
      %v436 = vld [vmem:[%s3 + $0x230] sm:$0xff]
      %v437 = vld [vmem:[%s3 + $0x238] sm:$0xff]
      %v438 = vld [vmem:[%s3 + $0x240] sm:$0xff]
      %v439 = vld [vmem:[%s3 + $0x248] sm:$0xff]
      %v440 = vld [vmem:[%s3 + $0x250] sm:$0xff]
      %v441 = vld [vmem:[%s3 + $0x258] sm:$0xff]
      %v442 = vld [vmem:[%s3 + $0x260] sm:$0xff]
      %v443 = vld [vmem:[%s3 + $0x268] sm:$0xff]
      %v444 = vld [vmem:[%s3 + $0x270] sm:$0xff]
      %v445 = vld [vmem:[%s3 + $0x278] sm:$0xff]
      %v446 = vld [vmem:[%s3 + $0x280] sm:$0xff]
      %v447 = vld [vmem:[%s3 + $0x288] sm:$0xff]
      %v448 = vld [vmem:[%s3 + $0x290] sm:$0xff]
      %v449 = vld [vmem:[%s3 + $0x298] sm:$0xff]
      %v450 = vld [vmem:[%s3 + $0x2a0] sm:$0xff]
      %v451 = vld [vmem:[%s3 + $0x2a8] sm:$0xff]
      %v452 = vld [vmem:[%s3 + $0x2b0] sm:$0xff]
      %v453 = vld [vmem:[%s3 + $0x2b8] sm:$0xff]
      %v454 = vld [vmem:[%s3 + $0x2c0] sm:$0xff]
      %v455 = vld [vmem:[%s3 + $0x2c8] sm:$0xff]
      %v456 = vld [vmem:[%s3 + $0x2d0] sm:$0xff]
      %v457 = vld [vmem:[%s3 + $0x2d8] sm:$0xff]
      %v458 = vld [vmem:[%s3 + $0x2e0] sm:$0xff]
      %v459 = vld [vmem:[%s3 + $0x2e8] sm:$0xff]
      %v460 = vld [vmem:[%s3 + $0x2f0] sm:$0xff]
      %v461 = vld [vmem:[%s3 + $0x2f8] sm:$0xff]
      %v462 = vld [vmem:[%s3 + $0x300] sm:$0xff]
      %v463 = vld [vmem:[%s3 + $0x308] sm:$0xff]
      %v464 = vld [vmem:[%s3 + $0x310] sm:$0xff]
      %v465 = vld [vmem:[%s3 + $0x318] sm:$0xff]
      %v466 = vld [vmem:[%s3 + $0x320] sm:$0xff]
      %v467 = vld [vmem:[%s3 + $0x328] sm:$0xff]
      %v468 = vld [vmem:[%s3 + $0x330] sm:$0xff]
      %v469 = vld [vmem:[%s3 + $0x338] sm:$0xff]
      %v470 = vld [vmem:[%s3 + $0x340] sm:$0xff]
      %v471 = vld [vmem:[%s3 + $0x348] sm:$0xff]
      %v472 = vld [vmem:[%s3 + $0x350] sm:$0xff]
      %v473 = vld [vmem:[%s3 + $0x358] sm:$0xff]
      %v474 = vld [vmem:[%s3 + $0x360] sm:$0xff]
      %v475 = vld [vmem:[%s3 + $0x368] sm:$0xff]
      %v476 = vld [vmem:[%s3 + $0x370] sm:$0xff]
      %v477 = vld [vmem:[%s3 + $0x378] sm:$0xff]
      %v478 = vld [vmem:[%s3 + $0x380] sm:$0xff]
      %v479 = vld [vmem:[%s3 + $0x388] sm:$0xff]
      %v480 = vld [vmem:[%s3 + $0x390] sm:$0xff]
      %v481 = vld [vmem:[%s3 + $0x398] sm:$0xff]
      %v482 = vld [vmem:[%s3 + $0x3a0] sm:$0xff]
      %v483 = vld [vmem:[%s3 + $0x3a8] sm:$0xff]
      %v484 = vld [vmem:[%s3 + $0x3b0] sm:$0xff]
      %v485 = vld [vmem:[%s3 + $0x3b8] sm:$0xff]
      %v486 = vld [vmem:[%s3 + $0x3c0] sm:$0xff]
      %v487 = vld [vmem:[%s3 + $0x3c8] sm:$0xff]
      %v488 = vld [vmem:[%s3 + $0x3d0] sm:$0xff]
      %v489 = vld [vmem:[%s3 + $0x3d8] sm:$0xff]
      %v490 = vld [vmem:[%s3 + $0x3e0] sm:$0xff]
      %v491 = vld [vmem:[%s3 + $0x3e8] sm:$0xff]
      %v492 = vld [vmem:[%s3 + $0x3f0] sm:$0xff]
      %v493 = vld [vmem:[%s3 + $0x3f8] sm:$0xff]
      %v494 = vld [vmem:[%s3 + $0x400] sm:$0xff]
      %v495 = vld [vmem:[%s3 + $0x408] sm:$0xff]
      %v496 = vld [vmem:[%s3 + $0x410] sm:$0xff]
      %v497 = vld [vmem:[%s3 + $0x418] sm:$0xff]
      %v498 = vld [vmem:[%s3 + $0x420] sm:$0xff]
      %v499 = vld [vmem:[%s3 + $0x428] sm:$0xff]
      %v500 = vld [vmem:[%s3 + $0x430] sm:$0xff]
      %v501 = vld [vmem:[%s3 + $0x438] sm:$0xff]
      %v502 = vld [vmem:[%s3 + $0x440] sm:$0xff]
      %v503 = vld [vmem:[%s3 + $0x448] sm:$0xff]
      %v504 = vld [vmem:[%s3 + $0x450] sm:$0xff]
      %v505 = vld [vmem:[%s3 + $0x458] sm:$0xff]
      %v506 = vld [vmem:[%s3 + $0x460] sm:$0xff]
      %v507 = vld [vmem:[%s3 + $0x468] sm:$0xff]
      %v508 = vld [vmem:[%s3 + $0x470] sm:$0xff]
      %v509 = vld [vmem:[%s3 + $0x478] sm:$0xff]
      %v510 = vld [vmem:[%s4] sm:$0x1]
      %v512 = vlaneseq
      %v513 = vshrl.u32 %v512, 7
      %v514 = vsub.s32 0, %v513
      %v515 = vrot.slane %v510, %v514
      %517 = vmatprep.subr.mxu0 0.0
      %518 = vmatpush1.msra.mxu0 %v381
      %519 = vmatprep.subr.mxu0 0.0
      %520 = vmatpush1.msra.mxu0 %v380
      %521 = vmatprep.subr.mxu0 0.0
      %522 = vmatpush1.msra.mxu0 %v379
      %523 = vmatprep.subr.mxu0 0.0
      %524 = vmatpush1.msra.mxu0 %v378
      %525 = vmatprep.subr.mxu0 0.0
      %526 = vmatpush1.msra.mxu0 %v377
      %527 = vmatprep.subr.mxu0 0.0
      %528 = vmatpush1.msra.mxu0 %v376
      %529 = vmatprep.subr.mxu0 0.0
      %530 = vmatpush1.msra.mxu0 %v375
      %531 = vmatprep.subr.mxu0 0.0
      %532 = vmatpush1.msra.mxu0 %v374
      %533 = vmatprep.subr.mxu0 0.0
      %534 = vmatpush1.msra.mxu0 %v373
      %535 = vmatprep.subr.mxu0 0.0
      %536 = vmatpush1.msra.mxu0 %v372
      %537 = vmatprep.subr.mxu0 0.0
      %538 = vmatpush1.msra.mxu0 %v371
      %539 = vmatprep.subr.mxu0 0.0
      %540 = vmatpush1.msra.mxu0 %v370
      %541 = vmatprep.subr.mxu0 0.0
      %542 = vmatpush1.msra.mxu0 %v369
      %543 = vmatprep.subr.mxu0 0.0
      %544 = vmatpush1.msra.mxu0 %v368
      %545 = vmatprep.subr.mxu0 0.0
      %546 = vmatpush1.msra.mxu0 %v367
      %547 = vmatprep.subr.mxu0 0.0
      %548 = vmatpush1.msra.mxu0 %v366
      %549 = vmatprep.subr.mxu0 0.0
      %550 = vmatpush2.msra.mxu0 %v397
      %551 = vmatprep.subr.mxu0 0.0
      %552 = vmatpush2.msra.mxu0 %v396
      %553 = vmatprep.subr.mxu0 0.0
      %554 = vmatpush2.msra.mxu0 %v395
      %555 = vmatprep.subr.mxu0 0.0
      %556 = vmatpush2.msra.mxu0 %v394
      %557 = vmatprep.subr.mxu0 0.0
      %558 = vmatpush2.msra.mxu0 %v393
      %559 = vmatprep.subr.mxu0 0.0
      %560 = vmatpush2.msra.mxu0 %v392
      %561 = vmatprep.subr.mxu0 0.0
      %562 = vmatpush2.msra.mxu0 %v391
      %563 = vmatprep.subr.mxu0 0.0
      %564 = vmatpush2.msra.mxu0 %v390
      %565 = vmatprep.subr.mxu0 0.0
      %566 = vmatpush2.msra.mxu0 %v389
      %567 = vmatprep.subr.mxu0 0.0
      %568 = vmatpush2.msra.mxu0 %v388
      %569 = vmatprep.subr.mxu0 0.0
      %570 = vmatpush2.msra.mxu0 %v387
      %571 = vmatprep.subr.mxu0 0.0
      %572 = vmatpush2.msra.mxu0 %v386
      %573 = vmatprep.subr.mxu0 0.0
      %574 = vmatpush2.msra.mxu0 %v385
      %575 = vmatprep.subr.mxu0 0.0
      %576 = vmatpush2.msra.mxu0 %v384
      %577 = vmatprep.subr.mxu0 0.0
      %578 = vmatpush2.msra.mxu0 %v383
      %579 = vmatprep.subr.mxu0 0.0
      %580 = vmatpush2.msra.mxu0 %v382
      %581 = vmatprep.mubr.f32.mxu0 %v350
      %582 = vmatmul.mubr.f32.gmra.mxu0 %v348
      %v583 = vpop.f32.mrf.mxu0
      %v584 = vadd.f32 %v515, %v583
      %v585 = vpop.f32.mrf.mxu0
      %586 = vmatprep.mubr.f32.mxu0 %v351
      %587 = vmatmul.mubr.f32.gmra.mxu0 %v349
      %v588 = vpop.f32.mrf.mxu0
      %v589 = vadd.f32 %v515, %v588
      %v590 = vpop.f32.mrf.mxu0
      %591 = vdwg.mxu0
      %592 = vmatprep.subr.mxu0 0.0
      %593 = vmatpush1.msra.mxu0 %v413
      %594 = vmatprep.subr.mxu0 0.0
      %595 = vmatpush1.msra.mxu0 %v412
      %596 = vmatprep.subr.mxu0 0.0
      %597 = vmatpush1.msra.mxu0 %v411
      %598 = vmatprep.subr.mxu0 0.0
      %599 = vmatpush1.msra.mxu0 %v410
      %600 = vmatprep.subr.mxu0 0.0
      %601 = vmatpush1.msra.mxu0 %v409
      %602 = vmatprep.subr.mxu0 0.0
      %603 = vmatpush1.msra.mxu0 %v408
      %604 = vmatprep.subr.mxu0 0.0
      %605 = vmatpush1.msra.mxu0 %v407
      %606 = vmatprep.subr.mxu0 0.0
      %607 = vmatpush1.msra.mxu0 %v406
      %608 = vmatprep.subr.mxu0 0.0
      %609 = vmatpush1.msra.mxu0 %v405
      %610 = vmatprep.subr.mxu0 0.0
      %611 = vmatpush1.msra.mxu0 %v404
      %612 = vmatprep.subr.mxu0 0.0
      %613 = vmatpush1.msra.mxu0 %v403
      %614 = vmatprep.subr.mxu0 0.0
      %615 = vmatpush1.msra.mxu0 %v402
      %616 = vmatprep.subr.mxu0 0.0
      %617 = vmatpush1.msra.mxu0 %v401
      %618 = vmatprep.subr.mxu0 0.0
      %619 = vmatpush1.msra.mxu0 %v400
      %620 = vmatprep.subr.mxu0 0.0
      %621 = vmatpush1.msra.mxu0 %v399
      %622 = vmatprep.subr.mxu0 0.0
      %623 = vmatpush1.msra.mxu0 %v398
      %624 = vmatprep.subr.mxu0 0.0
      %625 = vmatpush2.msra.mxu0 %v429
      %626 = vmatprep.subr.mxu0 0.0
      %627 = vmatpush2.msra.mxu0 %v428
      %628 = vmatprep.subr.mxu0 0.0
      %629 = vmatpush2.msra.mxu0 %v427
      %630 = vmatprep.subr.mxu0 0.0
      %631 = vmatpush2.msra.mxu0 %v426
      %632 = vmatprep.subr.mxu0 0.0
      %633 = vmatpush2.msra.mxu0 %v425
      %634 = vmatprep.subr.mxu0 0.0
      %635 = vmatpush2.msra.mxu0 %v424
      %636 = vmatprep.subr.mxu0 0.0
      %637 = vmatpush2.msra.mxu0 %v423
      %638 = vmatprep.subr.mxu0 0.0
      %639 = vmatpush2.msra.mxu0 %v422
      %640 = vmatprep.subr.mxu0 0.0
      %641 = vmatpush2.msra.mxu0 %v421
      %642 = vmatprep.subr.mxu0 0.0
      %643 = vmatpush2.msra.mxu0 %v420
      %644 = vmatprep.subr.mxu0 0.0
      %645 = vmatpush2.msra.mxu0 %v419
      %646 = vmatprep.subr.mxu0 0.0
      %647 = vmatpush2.msra.mxu0 %v418
      %648 = vmatprep.subr.mxu0 0.0
      %649 = vmatpush2.msra.mxu0 %v417
      %650 = vmatprep.subr.mxu0 0.0
      %651 = vmatpush2.msra.mxu0 %v416
      %652 = vmatprep.subr.mxu0 0.0
      %653 = vmatpush2.msra.mxu0 %v415
      %654 = vmatprep.subr.mxu0 0.0
      %655 = vmatpush2.msra.mxu0 %v414
      %656 = vmatprep.mubr.f32.mxu0 %v354
      %657 = vmatmul.mubr.f32.gmra.mxu0 %v352
      %v658 = vpop.f32.mrf.mxu0
      %v659 = vadd.f32 %v584, %v658
      %v660 = vpop.f32.mrf.mxu0
      %661 = vmatprep.mubr.f32.mxu0 %v355
      %662 = vmatmul.mubr.f32.gmra.mxu0 %v353
      %v663 = vpop.f32.mrf.mxu0
      %v664 = vadd.f32 %v589, %v663
      %v665 = vpop.f32.mrf.mxu0
      %666 = vdwg.mxu0
      %667 = vmatprep.subr.mxu0 0.0
      %668 = vmatpush1.msra.mxu0 %v445
      %669 = vmatprep.subr.mxu0 0.0
      %670 = vmatpush1.msra.mxu0 %v444
      %671 = vmatprep.subr.mxu0 0.0
      %672 = vmatpush1.msra.mxu0 %v443
      %673 = vmatprep.subr.mxu0 0.0
      %674 = vmatpush1.msra.mxu0 %v442
      %675 = vmatprep.subr.mxu0 0.0
      %676 = vmatpush1.msra.mxu0 %v441
      %677 = vmatprep.subr.mxu0 0.0
      %678 = vmatpush1.msra.mxu0 %v440
      %679 = vmatprep.subr.mxu0 0.0
      %680 = vmatpush1.msra.mxu0 %v439
      %681 = vmatprep.subr.mxu0 0.0
      %682 = vmatpush1.msra.mxu0 %v438
      %683 = vmatprep.subr.mxu0 0.0
      %684 = vmatpush1.msra.mxu0 %v437
      %685 = vmatprep.subr.mxu0 0.0
      %686 = vmatpush1.msra.mxu0 %v436
      %687 = vmatprep.subr.mxu0 0.0
      %688 = vmatpush1.msra.mxu0 %v435
      %689 = vmatprep.subr.mxu0 0.0
      %690 = vmatpush1.msra.mxu0 %v434
      %691 = vmatprep.subr.mxu0 0.0
      %692 = vmatpush1.msra.mxu0 %v433
      %693 = vmatprep.subr.mxu0 0.0
      %694 = vmatpush1.msra.mxu0 %v432
      %695 = vmatprep.subr.mxu0 0.0
      %696 = vmatpush1.msra.mxu0 %v431
      %697 = vmatprep.subr.mxu0 0.0
      %698 = vmatpush1.msra.mxu0 %v430
      %699 = vmatprep.subr.mxu0 0.0
      %700 = vmatpush2.msra.mxu0 %v461
      %701 = vmatprep.subr.mxu0 0.0
      %702 = vmatpush2.msra.mxu0 %v460
      %703 = vmatprep.subr.mxu0 0.0
      %704 = vmatpush2.msra.mxu0 %v459
      %705 = vmatprep.subr.mxu0 0.0
      %706 = vmatpush2.msra.mxu0 %v458
      %707 = vmatprep.subr.mxu0 0.0
      %708 = vmatpush2.msra.mxu0 %v457
      %709 = vmatprep.subr.mxu0 0.0
      %710 = vmatpush2.msra.mxu0 %v456
      %711 = vmatprep.subr.mxu0 0.0
      %712 = vmatpush2.msra.mxu0 %v455
      %713 = vmatprep.subr.mxu0 0.0
      %714 = vmatpush2.msra.mxu0 %v454
      %715 = vmatprep.subr.mxu0 0.0
      %716 = vmatpush2.msra.mxu0 %v453
      %717 = vmatprep.subr.mxu0 0.0
      %718 = vmatpush2.msra.mxu0 %v452
      %719 = vmatprep.subr.mxu0 0.0
      %720 = vmatpush2.msra.mxu0 %v451
      %721 = vmatprep.subr.mxu0 0.0
      %722 = vmatpush2.msra.mxu0 %v450
      %723 = vmatprep.subr.mxu0 0.0
      %724 = vmatpush2.msra.mxu0 %v449
      %725 = vmatprep.subr.mxu0 0.0
      %726 = vmatpush2.msra.mxu0 %v448
      %727 = vmatprep.subr.mxu0 0.0
      %728 = vmatpush2.msra.mxu0 %v447
      %729 = vmatprep.subr.mxu0 0.0
      %730 = vmatpush2.msra.mxu0 %v446
      %731 = vmatprep.mubr.f32.mxu0 %v358
      %732 = vmatmul.mubr.f32.gmra.mxu0 %v356
      %v733 = vpop.f32.mrf.mxu0
      %v734 = vadd.f32 %v659, %v733
      %v735 = vpop.f32.mrf.mxu0
      %736 = vmatprep.mubr.f32.mxu0 %v359
      %737 = vmatmul.mubr.f32.gmra.mxu0 %v357
      %v738 = vpop.f32.mrf.mxu0
      %v739 = vadd.f32 %v664, %v738
      %v740 = vpop.f32.mrf.mxu0
      %741 = vdwg.mxu0
      %742 = vmatprep.subr.mxu0 0.0
      %743 = vmatpush1.msra.mxu0 %v477
      %744 = vmatprep.subr.mxu0 0.0
      %745 = vmatpush1.msra.mxu0 %v476
      %746 = vmatprep.subr.mxu0 0.0
      %747 = vmatpush1.msra.mxu0 %v475
      %748 = vmatprep.subr.mxu0 0.0
      %749 = vmatpush1.msra.mxu0 %v474
      %750 = vmatprep.subr.mxu0 0.0
      %751 = vmatpush1.msra.mxu0 %v473
      %752 = vmatprep.subr.mxu0 0.0
      %753 = vmatpush1.msra.mxu0 %v472
      %754 = vmatprep.subr.mxu0 0.0
      %755 = vmatpush1.msra.mxu0 %v471
      %756 = vmatprep.subr.mxu0 0.0
      %757 = vmatpush1.msra.mxu0 %v470
      %758 = vmatprep.subr.mxu0 0.0
      %759 = vmatpush1.msra.mxu0 %v469
      %760 = vmatprep.subr.mxu0 0.0
      %761 = vmatpush1.msra.mxu0 %v468
      %762 = vmatprep.subr.mxu0 0.0
      %763 = vmatpush1.msra.mxu0 %v467
      %764 = vmatprep.subr.mxu0 0.0
      %765 = vmatpush1.msra.mxu0 %v466
      %766 = vmatprep.subr.mxu0 0.0
      %767 = vmatpush1.msra.mxu0 %v465
      %768 = vmatprep.subr.mxu0 0.0
      %769 = vmatpush1.msra.mxu0 %v464
      %770 = vmatprep.subr.mxu0 0.0
      %771 = vmatpush1.msra.mxu0 %v463
      %772 = vmatprep.subr.mxu0 0.0
      %773 = vmatpush1.msra.mxu0 %v462
      %774 = vmatprep.subr.mxu0 0.0
      %775 = vmatpush2.msra.mxu0 %v493
      %776 = vmatprep.subr.mxu0 0.0
      %777 = vmatpush2.msra.mxu0 %v492
      %778 = vmatprep.subr.mxu0 0.0
      %779 = vmatpush2.msra.mxu0 %v491
      %780 = vmatprep.subr.mxu0 0.0
      %781 = vmatpush2.msra.mxu0 %v490
      %782 = vmatprep.subr.mxu0 0.0
      %783 = vmatpush2.msra.mxu0 %v489
      %784 = vmatprep.subr.mxu0 0.0
      %785 = vmatpush2.msra.mxu0 %v488
      %786 = vmatprep.subr.mxu0 0.0
      %787 = vmatpush2.msra.mxu0 %v487
      %788 = vmatprep.subr.mxu0 0.0
      %789 = vmatpush2.msra.mxu0 %v486
      %790 = vmatprep.subr.mxu0 0.0
      %791 = vmatpush2.msra.mxu0 %v485
      %792 = vmatprep.subr.mxu0 0.0
      %793 = vmatpush2.msra.mxu0 %v484
      %794 = vmatprep.subr.mxu0 0.0
      %795 = vmatpush2.msra.mxu0 %v483
      %796 = vmatprep.subr.mxu0 0.0
      %797 = vmatpush2.msra.mxu0 %v482
      %798 = vmatprep.subr.mxu0 0.0
      %799 = vmatpush2.msra.mxu0 %v481
      %800 = vmatprep.subr.mxu0 0.0
      %801 = vmatpush2.msra.mxu0 %v480
      %802 = vmatprep.subr.mxu0 0.0
      %803 = vmatpush2.msra.mxu0 %v479
      %804 = vmatprep.subr.mxu0 0.0
      %805 = vmatpush2.msra.mxu0 %v478
      %806 = vmatprep.mubr.f32.mxu0 %v362
      %807 = vmatmul.mubr.f32.gmra.mxu0 %v360
      %v808 = vpop.f32.mrf.mxu0
      %v809 = vadd.f32 %v734, %v808
      %v810 = vpop.f32.mrf.mxu0
      %811 = vmatprep.mubr.f32.mxu0 %v363
      %812 = vmatmul.mubr.f32.gmra.mxu0 %v361
      %v813 = vpop.f32.mrf.mxu0
      %v814 = vadd.f32 %v739, %v813
      %v815 = vpop.f32.mrf.mxu0
      %816 = vdwg.mxu0
      %817 = vmatprep.subr.mxu0 0.0
      %818 = vmatpush1.msra.mxu0 %v509
      %819 = vmatprep.subr.mxu0 0.0
      %820 = vmatpush1.msra.mxu0 %v508
      %821 = vmatprep.subr.mxu0 0.0
      %822 = vmatpush1.msra.mxu0 %v507
      %823 = vmatprep.subr.mxu0 0.0
      %824 = vmatpush1.msra.mxu0 %v506
      %825 = vmatprep.subr.mxu0 0.0
      %826 = vmatpush1.msra.mxu0 %v505
      %827 = vmatprep.subr.mxu0 0.0
      %828 = vmatpush1.msra.mxu0 %v504
      %829 = vmatprep.subr.mxu0 0.0
      %830 = vmatpush1.msra.mxu0 %v503
      %831 = vmatprep.subr.mxu0 0.0
      %832 = vmatpush1.msra.mxu0 %v502
      %833 = vmatprep.subr.mxu0 0.0
      %834 = vmatpush1.msra.mxu0 %v501
      %835 = vmatprep.subr.mxu0 0.0
      %836 = vmatpush1.msra.mxu0 %v500
      %837 = vmatprep.subr.mxu0 0.0
      %838 = vmatpush1.msra.mxu0 %v499
      %839 = vmatprep.subr.mxu0 0.0
      %840 = vmatpush1.msra.mxu0 %v498
      %841 = vmatprep.subr.mxu0 0.0
      %842 = vmatpush1.msra.mxu0 %v497
      %843 = vmatprep.subr.mxu0 0.0
      %844 = vmatpush1.msra.mxu0 %v496
      %845 = vmatprep.subr.mxu0 0.0
      %846 = vmatpush1.msra.mxu0 %v495
      %847 = vmatprep.subr.mxu0 0.0
      %848 = vmatpush1.msra.mxu0 %v494
      %849 = vmatprep.subr.mxu0 0.0
      %850 = vmatpush2.msra.mxu0 0.0
      %851 = vmatprep.subr.mxu0 0.0
      %852 = vmatpush2.msra.mxu0 0.0
      %853 = vmatprep.subr.mxu0 0.0
      %854 = vmatpush2.msra.mxu0 0.0
      %855 = vmatprep.subr.mxu0 0.0
      %856 = vmatpush2.msra.mxu0 0.0
      %857 = vmatprep.subr.mxu0 0.0
      %858 = vmatpush2.msra.mxu0 0.0
      %859 = vmatprep.subr.mxu0 0.0
      %860 = vmatpush2.msra.mxu0 0.0
      %861 = vmatprep.subr.mxu0 0.0
      %862 = vmatpush2.msra.mxu0 0.0
      %863 = vmatprep.subr.mxu0 0.0
      %864 = vmatpush2.msra.mxu0 0.0
      %865 = vmatprep.subr.mxu0 0.0
      %866 = vmatpush2.msra.mxu0 0.0
      %867 = vmatprep.subr.mxu0 0.0
      %868 = vmatpush2.msra.mxu0 0.0
      %869 = vmatprep.subr.mxu0 0.0
      %870 = vmatpush2.msra.mxu0 0.0
      %871 = vmatprep.subr.mxu0 0.0
      %872 = vmatpush2.msra.mxu0 0.0
      %873 = vmatprep.subr.mxu0 0.0
      %874 = vmatpush2.msra.mxu0 0.0
      %875 = vmatprep.subr.mxu0 0.0
      %876 = vmatpush2.msra.mxu0 0.0
      %877 = vmatprep.subr.mxu0 0.0
      %878 = vmatpush2.msra.mxu0 0.0
      %879 = vmatprep.subr.mxu0 0.0
      %880 = vmatpush2.msra.mxu0 0.0
      %881 = vmatprep.mubr.f32.mxu0 0.0
      %882 = vmatmul.mubr.f32.gmra.mxu0 %v364
      %v883 = vpop.f32.mrf.mxu0
      %v884 = vadd.f32 %v809, %v883
      %v885 = vpop.f32.mrf.mxu0
      %886 = vmatprep.mubr.f32.mxu0 0.0
      %887 = vmatmul.mubr.f32.gmra.mxu0 %v365
      %v888 = vpop.f32.mrf.mxu0
      %v889 = vadd.f32 %v814, %v888
      %v890 = vpop.f32.mrf.mxu0
      %891 = vdwg.mxu0
      %v892 = vmax.f32 %v884, 0.0
      %v893 = vmax.f32 %v889, 0.0
      %v894 = vadd.f32 %v892, %v340
      %v895 = vadd.f32 %v893, %v342
      %896 = vst [vmem:[%s224] sm:$0xff] %v894
      %897 = vst [vmem:[%s224 + $0x8] sm:$0xff] %v895
      %p898 = scmp.lt.s32.totalorder %s16, 1
      %s899 = scalar_select %p898, %s16, 1
      %s900 = smul.addr %s899, 2
      %s901 = smul.addr %s900, 8
      %s902 = scalar_lea.vmem %s5, %s901
      // Predicated region
      $region41: #{tcn_gcn_unit_forward.1} parent=39 // pred_check
        %p903 = pneg %p144
      $region42: #{tcn_gcn_unit_forward.1} parent=39 // pred_check_branch
        %905 = sbr.rel (%p903) target = $region44
      $region43: #{tcn_gcn_unit_forward.1} parent=39 // pred_region
        _
      $region44: #{tcn_gcn_unit_forward.1} parent=39 // pred_fallthru
        _
    $region40: #{tcn_gcn_unit_forward.1} parent=5 // pred_fallthru
      _
    %p906 = scmp.le.s32.totalorder 2, %s11
    // Predicated region
    $region45: #{tcn_gcn_unit_forward.1} parent=5 // pred_check
      %p907 = pneg %p906
    $region46: #{tcn_gcn_unit_forward.1} parent=5 // pred_check_branch
      %909 = sbr.rel (%p907) target = $region48
    $region47: #{tcn_gcn_unit_forward.1} parent=5 // pred_region
      %s910 = ssub.s32 %s11, 2
      // Predicated region
      $region49: #{tcn_gcn_unit_forward.1} parent=47 // pred_check
        %p911 = pneg %p150
      $region50: #{tcn_gcn_unit_forward.1} parent=47 // pred_check_branch
        %913 = sbr.rel (%p911) target = $region52
      $region51: #{tcn_gcn_unit_forward.1} parent=47 // pred_region
        %p914 = scmp.lt.s32.totalorder %s17, 1
        %s915 = scalar_select %p914, %s17, 1
        %s916 = smul.addr %s915, 2
        %s917 = smul.addr %s916, 8
        %s918 = scalar_lea.vmem %s5, %s917
      $region52: #{tcn_gcn_unit_forward.1} parent=47 // pred_fallthru
        _
    $region48: #{tcn_gcn_unit_forward.1} parent=5 // pred_fallthru
      _
  $region6: #{tcn_gcn_unit_forward.1} parent=0 // loop_footer
    %s15 = sadd.s32 1, %s11
  $region7: #{tcn_gcn_unit_forward.1} parent=0 // loop_footer_branch
    %10 = sbr.rel target = $region3
  $region8: #{tcn_gcn_unit_forward.1} parent=0 // loop_exit
    _

</llo_original>
